<compile_context>
chip_gen: v6e
topology: v6e:2x2x1
jax: 0.10.0
libtpu: 0.0.40
codegen_flags: <defaults>
</compile_context>

<pallas_src>
import math
import functools

import jax
import jax.numpy as jnp
from jax.experimental import pallas as pl
from jax.experimental.pallas import tpu as pltpu

# Globals referenced (but not defined) by the original PyTorch snippet — fixed
# deterministically here.
INV_SCALE_FACTOR = math.sqrt(10.0)   # v2 = v1 / inv_scale_factor
DROPOUT_P = 0.0                      # F.dropout probability (0.0 => identity)


def _sublane(dtype):
    itemsize = jnp.dtype(dtype).itemsize
    if itemsize >= 4:
        return 8
    if itemsize == 2:
        return 16
    return 32


def _pick_sq_tile(sq, dtype):
    """Largest dtype-aligned tile that divides Sq evenly (else full extent)."""
    sub = _sublane(dtype)
    for t in (512, 256, 128, 64, 32, 16, 8):
        if t >= sub and t % sub == 0 and sq % t == 0 and sq // t >= 2:
            return t
    return sq


def _attn_core(q_ref, k_ref, v_ref, o_ref, *, scale, dropout_p, seed_ref=None):
    # q_ref: (tq, D), k_ref: (Sk, D), v_ref: (Sk, Dv), o_ref: (tq, Dv)
    # Fold the 1/inv_scale_factor into Q (tq*D multiplies, not tq*Sk).
    q = q_ref[...] * jnp.asarray(scale, dtype=q_ref.dtype)
    k = k_ref[...]
    v = v_ref[...]

    # v1/v2 = (query * scale) @ key^T — contract feature dim directly
    # (no in-kernel transpose), f32 accumulation on the MXU.
    s = jax.lax.dot_general(
        q, k, dimension_numbers=(((1,), (1,)), ((), ())),
        preferred_element_type=jnp.float32)

    # v3 = softmax(v2, dim=-1), numerically stable, exact normalization.
    s = s - jnp.max(s, axis=-1, keepdims=True)
    e = jnp.exp(s)
    p = e / jnp.sum(e, axis=-1, keepdims=True)

    # v4 = dropout(v3, p) — inverted dropout via the TPU PRNG, integer
    # threshold compare on the raw bits (no float conversion per element).
    if dropout_p > 0.0:
        pltpu.prng_seed(seed_ref[0]
                        + pl.program_id(0) * pl.num_programs(1)
                        + pl.program_id(1))
        bits = pltpu.bitcast(pltpu.prng_random_bits(p.shape), jnp.uint32)
        thresh = jnp.uint32(min(int(round(dropout_p * 2.0 ** 32)), 2 ** 32 - 1))
        p = jnp.where(bits >= thresh, p * (1.0 / (1.0 - dropout_p)), 0.0)

    # v5 = v4 @ value (operands in input dtype, f32 accumulation).
    o_ref[...] = jnp.dot(p.astype(v.dtype), v,
                         preferred_element_type=jnp.float32).astype(o_ref.dtype)


def sdpa_pallas(query, key, value, *, inv_scale=INV_SCALE_FACTOR,
                dropout_p=DROPOUT_P, seed=0):
    B, Sq, D = query.shape
    Bk, Sk, Dk = key.shape
    Bv, Skv, Dv = value.shape
    assert B == Bk == Bv and D == Dk and Sk == Skv

    scale = 1.0 / float(inv_scale)
    out_dtype = query.dtype
    out_shape = jax.ShapeDtypeStruct((B, Sq, Dv), out_dtype)

    # Optional Sq tiling (gives a second "parallel" grid axis when Sq divides
    # evenly into sublane-aligned tiles); otherwise a single full-extent block.
    tq = _pick_sq_tile(Sq, query.dtype)
    n_sq = Sq // tq
    grid = (B, n_sq)

    cparams = pltpu.CompilerParams(
        dimension_semantics=("parallel", "parallel"))

    if dropout_p > 0.0:
        core = functools.partial(_attn_core, scale=scale,
                                 dropout_p=float(dropout_p))

        def kernel(seed_ref, q_ref, k_ref, v_ref, o_ref):
            core(q_ref, k_ref, v_ref, o_ref, seed_ref=seed_ref)

        grid_spec = pltpu.PrefetchScalarGridSpec(
            num_scalar_prefetch=1,
            grid=grid,
            in_specs=[
                pl.BlockSpec((None, tq, D), lambda b, i, s: (b, i, 0)),
                pl.BlockSpec((None, Sk, D), lambda b, i, s: (b, 0, 0)),
                pl.BlockSpec((None, Sk, Dv), lambda b, i, s: (b, 0, 0)),
            ],
            out_specs=pl.BlockSpec((None, tq, Dv), lambda b, i, s: (b, i, 0)),
        )
        out = pl.pallas_call(
            kernel, out_shape=out_shape, grid_spec=grid_spec,
            compiler_params=cparams,
        )(jnp.array([seed], dtype=jnp.int32), query, key, value)
    else:
        kernel = functools.partial(_attn_core, scale=scale, dropout_p=0.0)
        out = pl.pallas_call(
            kernel,
            out_shape=out_shape,
            grid=grid,
            in_specs=[
                pl.BlockSpec((None, tq, D), lambda b, i: (b, i, 0)),
                pl.BlockSpec((None, Sk, D), lambda b, i: (b, 0, 0)),
                pl.BlockSpec((None, Sk, Dv), lambda b, i: (b, 0, 0)),
            ],
            out_specs=pl.BlockSpec((None, tq, Dv), lambda b, i: (b, i, 0)),
            compiler_params=cparams,
        )(query, key, value)

    return out


def sdpa_reference(query, key, value, *, inv_scale=INV_SCALE_FACTOR):
    # Pure-JAX reference (dropout_p == 0.0 path).
    s = jnp.einsum('bqd,bkd->bqk', query, key,
                   precision=jax.lax.Precision.HIGHEST) / inv_scale
    p = jax.nn.softmax(s, axis=-1)
    return jnp.einsum('bqk,bkd->bqd', p, value,
                      precision=jax.lax.Precision.HIGHEST)


if __name__ == "__main__":
    k0, k1, k2 = jax.random.split(jax.random.PRNGKey(0), 3)

    # Shapes mirror the PyTorch snippet: query (1,100,10), key (1,200,10),
    # value (1,200,10).
    query = jax.random.normal(k0, (1, 100, 10), dtype=jnp.float32)
    key = jax.random.normal(k1, (1, 200, 10), dtype=jnp.float32)
    value = jax.random.normal(k2, (1, 200, 10), dtype=jnp.float32)

    out = sdpa_pallas(query, key, value)
    jax.block_until_ready(out)

    ref = sdpa_reference(query, key, value)
    assert out.shape == (1, 100, 10)
    assert out.dtype == query.dtype
    assert jnp.allclose(out, ref, atol=1e-3, rtol=1e-3), "mismatch vs reference"

    print("KERNEL_OK")
</pallas_src>

<mosaic_0001>
module attributes {stable_mosaic.version = 11 : i64} {
  func.func @_attn_core(%arg0: i32, %arg1: i32, %arg2: memref<1x100x10xf32, #tpu.memory_space<vmem>>, %arg3: memref<1x200x10xf32, #tpu.memory_space<vmem>>, %arg4: memref<1x200x10xf32, #tpu.memory_space<vmem>>, %arg5: memref<1x100x10xf32, #tpu.memory_space<vmem>>) attributes {dimension_semantics = [#tpu.dimension_semantics<parallel>, #tpu.dimension_semantics<parallel>], iteration_bounds = array<i64: 1, 1>, scalar_prefetch = 0 : i64, scratch_operands = 0 : i64, tpu.core_type = #tpu.core_type<tc>, window_params = [{transform_indices = @transform_0, window_bounds = array<i64: 1, 100, 10>}, {transform_indices = @transform_1, window_bounds = array<i64: 1, 200, 10>}, {transform_indices = @transform_2, window_bounds = array<i64: 1, 200, 10>}, {transform_indices = @transform_3, window_bounds = array<i64: 1, 100, 10>}]} {
    %c0 = arith.constant 0 : index
    %c0_0 = arith.constant 0 : index
    %c0_1 = arith.constant 0 : index
    %0 = vector.load %arg2[%c0, %c0_0, %c0_1] : memref<1x100x10xf32, #tpu.memory_space<vmem>>, vector<1x100x10xf32>
    %1 = vector.shape_cast %0 : vector<1x100x10xf32> to vector<100x10xf32>
    %cst = arith.constant 0.316227764 : f32
    %2 = vector.broadcast %cst : f32 to vector<100x10xf32>
    %3 = arith.mulf %1, %2 : vector<100x10xf32>
    %c0_2 = arith.constant 0 : index
    %c0_3 = arith.constant 0 : index
    %c0_4 = arith.constant 0 : index
    %4 = vector.load %arg3[%c0_2, %c0_3, %c0_4] : memref<1x200x10xf32, #tpu.memory_space<vmem>>, vector<1x200x10xf32>
    %5 = vector.shape_cast %4 : vector<1x200x10xf32> to vector<200x10xf32>
    %c0_5 = arith.constant 0 : index
    %c0_6 = arith.constant 0 : index
    %c0_7 = arith.constant 0 : index
    %6 = vector.load %arg4[%c0_5, %c0_6, %c0_7] : memref<1x200x10xf32, #tpu.memory_space<vmem>>, vector<1x200x10xf32>
    %7 = vector.shape_cast %6 : vector<1x200x10xf32> to vector<200x10xf32>
    %cst_8 = arith.constant dense<0.000000e+00> : vector<100x200xf32>
    %8 = tpu.matmul %3, %5, %cst_8 {dimension_numbers = #tpu.dot_dimension_numbers<[1], [1], [0], [0], [0, 0, 1, 0], [], []>} : vector<100x10xf32>, vector<200x10xf32>, vector<100x200xf32> -> vector<100x200xf32>
    %cst_9 = arith.constant dense<0xFF800000> : vector<100xf32>
    %9 = vector.multi_reduction <maximumf>, %8, %cst_9 [1] : vector<100x200xf32> to vector<100xf32>
    %10 = vector.shape_cast %9 : vector<100xf32> to vector<100x1xf32>
    %11 = vector.broadcast %10 : vector<100x1xf32> to vector<100x200xf32>
    %12 = arith.subf %8, %11 : vector<100x200xf32>
    %13 = math.exp %12 : vector<100x200xf32>
    %cst_10 = arith.constant dense<0.000000e+00> : vector<100xf32>
    %14 = vector.multi_reduction <add>, %13, %cst_10 [1] : vector<100x200xf32> to vector<100xf32>
    %15 = vector.shape_cast %14 : vector<100xf32> to vector<100x1xf32>
    %16 = vector.broadcast %15 : vector<100x1xf32> to vector<100x200xf32>
    %17 = arith.divf %13, %16 : vector<100x200xf32>
    %cst_11 = arith.constant dense<0.000000e+00> : vector<100x10xf32>
    %18 = tpu.matmul %17, %7, %cst_11 {dimension_numbers = #tpu.dot_dimension_numbers<[1], [0], [0], [1], [0, 0, 1, 1], [], []>} : vector<100x200xf32>, vector<200x10xf32>, vector<100x10xf32> -> vector<100x10xf32>
    %c0_12 = arith.constant 0 : index
    %c0_13 = arith.constant 0 : index
    %c0_14 = arith.constant 0 : index
    %19 = vector.load %arg5[%c0_12, %c0_13, %c0_14] : memref<1x100x10xf32, #tpu.memory_space<vmem>>, vector<1x100x10xf32>
    %20 = vector.shape_cast %19 : vector<1x100x10xf32> to vector<100x10xf32>
    %21 = vector.shape_cast %18 : vector<100x10xf32> to vector<1x100x10xf32>
    tpu.vector_store %arg5[%c0_12, %c0_13, %c0_14], %21 {strides = array<i32>} : memref<1x100x10xf32, #tpu.memory_space<vmem>>, vector<1x100x10xf32>,
    return
  }
  func.func @transform_0(%arg0: i32, %arg1: i32) -> (i32, i32, i32) {
    %c0_i32 = arith.constant 0 : i32
    %c0_i32_0 = arith.constant 0 : i32
    return %arg0, %arg1, %c0_i32 : i32, i32, i32
  }
  func.func @transform_1(%arg0: i32, %arg1: i32) -> (i32, i32, i32) {
    %c0_i32 = arith.constant 0 : i32
    %c0_i32_0 = arith.constant 0 : i32
    %c0_i32_1 = arith.constant 0 : i32
    return %arg0, %c0_i32, %c0_i32_0 : i32, i32, i32
  }
  func.func @transform_2(%arg0: i32, %arg1: i32) -> (i32, i32, i32) {
    %c0_i32 = arith.constant 0 : i32
    %c0_i32_0 = arith.constant 0 : i32
    %c0_i32_1 = arith.constant 0 : i32
    return %arg0, %c0_i32, %c0_i32_0 : i32, i32, i32
  }
  func.func @transform_3(%arg0: i32, %arg1: i32) -> (i32, i32, i32) {
    %c0_i32 = arith.constant 0 : i32
    %c0_i32_0 = arith.constant 0 : i32
    return %arg0, %arg1, %c0_i32 : i32, i32, i32
  }
}

</mosaic_0001>

<llo_original>
// kernel: tpu_custom_call.1
$region0: #{tpu_custom_call.1}
  #allocation0 [shape = 'u32[]', space=smem, size = 0x4, offset = 0x4, fixed_abs, tag = 'smem constant byte address 0x4 - core index']
  #allocation1 [shape = 'u32[144,128]{1,0:T(1,128)}', space=vmem, size = 0x12000, scoped, tag = 'internal scratch']
  %s0 = inlined_call_operand.vmem [shape: f32[1,100,10], index: 0, kind: input, shape index: {}]
  %s1 = inlined_call_operand.vmem [shape: f32[1,200,10], index: 1, kind: input, shape index: {}]
  %s2 = inlined_call_operand.vmem [shape: f32[1,200,10], index: 2, kind: input, shape index: {}]
  %s3 = inlined_call_operand.vmem [shape: f32[1,100,10], index: 3, kind: output, shape index: {}]
  %s4 = sld [smem:[#allocation0]]
  $region22: #{tpu_custom_call.1} parent=0
    _
  %s6 = ssub.s32 1, %s4
  %s7 = scalar_select 0, %s6, %s4
  // Predicated region
  $region2: #{tpu_custom_call.1} parent=0 // pred_check
    _
  $region3: #{tpu_custom_call.1} parent=0 // pred_check_branch
    %9 = sbr.rel (0) target = $region5
  $region4: #{tpu_custom_call.1} parent=0 // pred_region
    _
  $region5: #{tpu_custom_call.1} parent=0 // pred_fallthru
    _
  // Predicated region
  $region6: #{tpu_custom_call.1} parent=0 // pred_check
    _
  $region7: #{tpu_custom_call.1} parent=0 // pred_check_branch
    %11 = sbr.rel (0) target = $region9
  $region8: #{tpu_custom_call.1} parent=0 // pred_region
    _
  $region9: #{tpu_custom_call.1} parent=0 // pred_fallthru
    _
  // Predicated region
  $region10: #{tpu_custom_call.1} parent=0 // pred_check
    _
  $region11: #{tpu_custom_call.1} parent=0 // pred_check_branch
    %13 = sbr.rel (0) target = $region13
  $region12: #{tpu_custom_call.1} parent=0 // pred_region
    _
  $region13: #{tpu_custom_call.1} parent=0 // pred_fallthru
    _
  %v14 = vld [vmem:[%s0] sm:$0xff]
  %v15 = vld [vmem:[%s0 + $0x8] sm:$0xff]
  %v16 = vld [vmem:[%s0 + $0x10] sm:$0xff]
  %v17 = vld [vmem:[%s0 + $0x18] sm:$0xff]
  %v18 = vld [vmem:[%s0 + $0x20] sm:$0xff]
  %v19 = vld [vmem:[%s0 + $0x28] sm:$0xff]
  %v20 = vld [vmem:[%s0 + $0x30] sm:$0xff]
  %v21 = vld [vmem:[%s0 + $0x38] sm:$0xff]
  %v22 = vld [vmem:[%s0 + $0x40] sm:$0xff]
  %v23 = vld [vmem:[%s0 + $0x48] sm:$0xff]
  %v24 = vld [vmem:[%s0 + $0x50] sm:$0xff]
  %v25 = vld [vmem:[%s0 + $0x58] sm:$0xff]
  %v26 = vld [vmem:[%s0 + $0x60] sm:$0xf]
  %v27 = vmul.f32 %v14, 0.31622776
  %v28 = vmul.f32 %v15, 0.31622776
  %v29 = vmul.f32 %v16, 0.31622776
  %v30 = vmul.f32 %v17, 0.31622776
  %v31 = vmul.f32 %v18, 0.31622776
  %v32 = vmul.f32 %v19, 0.31622776
  %v33 = vmul.f32 %v20, 0.31622776
  %v34 = vmul.f32 %v21, 0.31622776
  %v35 = vmul.f32 %v22, 0.31622776
  %v36 = vmul.f32 %v23, 0.31622776
  %v37 = vmul.f32 %v24, 0.31622776
  %v38 = vmul.f32 %v25, 0.31622776
  %v39 = vmul.f32 %v26, 0.31622776
  %v40 = vld [vmem:[%s1] sm:$0xff]
  %v41 = vld [vmem:[%s1 + $0x8] sm:$0xff]
  %v42 = vld [vmem:[%s1 + $0x10] sm:$0xff]
  %v43 = vld [vmem:[%s1 + $0x18] sm:$0xff]
  %v44 = vld [vmem:[%s1 + $0x20] sm:$0xff]
  %v45 = vld [vmem:[%s1 + $0x28] sm:$0xff]
  %v46 = vld [vmem:[%s1 + $0x30] sm:$0xff]
  %v47 = vld [vmem:[%s1 + $0x38] sm:$0xff]
  %v48 = vld [vmem:[%s1 + $0x40] sm:$0xff]
  %v49 = vld [vmem:[%s1 + $0x48] sm:$0xff]
  %v50 = vld [vmem:[%s1 + $0x50] sm:$0xff]
  %v51 = vld [vmem:[%s1 + $0x58] sm:$0xff]
  %v52 = vld [vmem:[%s1 + $0x60] sm:$0xff]
  %v53 = vld [vmem:[%s1 + $0x68] sm:$0xff]
  %v54 = vld [vmem:[%s1 + $0x70] sm:$0xff]
  %v55 = vld [vmem:[%s1 + $0x78] sm:$0xff]
  %v56 = vld [vmem:[%s1 + $0x80] sm:$0xff]
  %v57 = vld [vmem:[%s1 + $0x88] sm:$0xff]
  %v58 = vld [vmem:[%s1 + $0x90] sm:$0xff]
  %v59 = vld [vmem:[%s1 + $0x98] sm:$0xff]
  %v60 = vld [vmem:[%s1 + $0xa0] sm:$0xff]
  %v61 = vld [vmem:[%s1 + $0xa8] sm:$0xff]
  %v62 = vld [vmem:[%s1 + $0xb0] sm:$0xff]
  %v63 = vld [vmem:[%s1 + $0xb8] sm:$0xff]
  %v64 = vld [vmem:[%s1 + $0xc0] sm:$0xff]
  %v65 = vld [vmem:[%s2] sm:$0xff]
  %v66 = vld [vmem:[%s2 + $0x8] sm:$0xff]
  %v67 = vld [vmem:[%s2 + $0x10] sm:$0xff]
  %v68 = vld [vmem:[%s2 + $0x18] sm:$0xff]
  %v69 = vld [vmem:[%s2 + $0x20] sm:$0xff]
  %v70 = vld [vmem:[%s2 + $0x28] sm:$0xff]
  %v71 = vld [vmem:[%s2 + $0x30] sm:$0xff]
  %v72 = vld [vmem:[%s2 + $0x38] sm:$0xff]
  %v73 = vld [vmem:[%s2 + $0x40] sm:$0xff]
  %v74 = vld [vmem:[%s2 + $0x48] sm:$0xff]
  %v75 = vld [vmem:[%s2 + $0x50] sm:$0xff]
  %v76 = vld [vmem:[%s2 + $0x58] sm:$0xff]
  %v77 = vld [vmem:[%s2 + $0x60] sm:$0xff]
  %v78 = vld [vmem:[%s2 + $0x68] sm:$0xff]
  %v79 = vld [vmem:[%s2 + $0x70] sm:$0xff]
  %v80 = vld [vmem:[%s2 + $0x78] sm:$0xff]
  %v81 = vld [vmem:[%s2 + $0x80] sm:$0xff]
  %v82 = vld [vmem:[%s2 + $0x88] sm:$0xff]
  %v83 = vld [vmem:[%s2 + $0x90] sm:$0xff]
  %v84 = vld [vmem:[%s2 + $0x98] sm:$0xff]
  %v85 = vld [vmem:[%s2 + $0xa0] sm:$0xff]
  %v86 = vld [vmem:[%s2 + $0xa8] sm:$0xff]
  %v87 = vld [vmem:[%s2 + $0xb0] sm:$0xff]
  %v88 = vld [vmem:[%s2 + $0xb8] sm:$0xff]
  %v89 = vld [vmem:[%s2 + $0xc0] sm:$0xff]
  %vm90 = vcmask 80896
  %v92 = vsel %vm90, %v27, 0
  %v95 = vsel %vm90, %v28, 0
  %v98 = vsel %vm90, %v29, 0
  %v101 = vsel %vm90, %v30, 0
  %v104 = vsel %vm90, %v31, 0
  %v107 = vsel %vm90, %v32, 0
  %v110 = vsel %vm90, %v33, 0
  %v113 = vsel %vm90, %v34, 0
  %v116 = vsel %vm90, %v35, 0
  %v119 = vsel %vm90, %v36, 0
  %v122 = vsel %vm90, %v37, 0
  %v125 = vsel %vm90, %v38, 0
  %v128 = vsel %vm90, %v39, 0
  %v131 = vsel %vm90, %v40, 0
  %v134 = vsel %vm90, %v41, 0
  %v137 = vsel %vm90, %v42, 0
  %v140 = vsel %vm90, %v43, 0
  %v143 = vsel %vm90, %v44, 0
  %v146 = vsel %vm90, %v45, 0
  %v149 = vsel %vm90, %v46, 0
  %v152 = vsel %vm90, %v47, 0
  %v155 = vsel %vm90, %v48, 0
  %v158 = vsel %vm90, %v49, 0
  %v161 = vsel %vm90, %v50, 0
  %v164 = vsel %vm90, %v51, 0
  %v167 = vsel %vm90, %v52, 0
  %v170 = vsel %vm90, %v53, 0
  %v173 = vsel %vm90, %v54, 0
  %v176 = vsel %vm90, %v55, 0
  %v179 = vsel %vm90, %v56, 0
  %v182 = vsel %vm90, %v57, 0
  %v185 = vsel %vm90, %v58, 0
  %v188 = vsel %vm90, %v59, 0
  %v191 = vsel %vm90, %v60, 0
  %v194 = vsel %vm90, %v61, 0
  %v197 = vsel %vm90, %v62, 0
  %v200 = vsel %vm90, %v63, 0
  %v203 = vsel %vm90, %v64, 0
  %205 = vmatprep.subr.mxu0 0.0
  %206 = vmatpush1.xpose.msra.mxu0 %v176
  %207 = vmatprep.subr.mxu0 0.0
  %208 = vmatpush1.xpose.msra.mxu0 %v173
  %209 = vmatprep.subr.mxu0 0.0
  %210 = vmatpush1.xpose.msra.mxu0 %v170
  %211 = vmatprep.subr.mxu0 0.0
  %212 = vmatpush1.xpose.msra.mxu0 %v167
  %213 = vmatprep.subr.mxu0 0.0
  %214 = vmatpush1.xpose.msra.mxu0 %v164
  %215 = vmatprep.subr.mxu0 0.0
  %216 = vmatpush1.xpose.msra.mxu0 %v161
  %217 = vmatprep.subr.mxu0 0.0
  %218 = vmatpush1.xpose.msra.mxu0 %v158
  %219 = vmatprep.subr.mxu0 0.0
  %220 = vmatpush1.xpose.msra.mxu0 %v155
  %221 = vmatprep.subr.mxu0 0.0
  %222 = vmatpush1.xpose.msra.mxu0 %v152
  %223 = vmatprep.subr.mxu0 0.0
  %224 = vmatpush1.xpose.msra.mxu0 %v149
  %225 = vmatprep.subr.mxu0 0.0
  %226 = vmatpush1.xpose.msra.mxu0 %v146
  %227 = vmatprep.subr.mxu0 0.0
  %228 = vmatpush1.xpose.msra.mxu0 %v143
  %229 = vmatprep.subr.mxu0 0.0
  %230 = vmatpush1.xpose.msra.mxu0 %v140
  %231 = vmatprep.subr.mxu0 0.0
  %232 = vmatpush1.xpose.msra.mxu0 %v137
  %233 = vmatprep.subr.mxu0 0.0
  %234 = vmatpush1.xpose.msra.mxu0 %v134
  %235 = vmatprep.subr.mxu0 0.0
  %236 = vmatpush1.xpose.msra.mxu0 %v131
  %237 = vmatprep.subr.mxu0 0.0
  %238 = vmatpush2.xpose.msra.mxu0 0.0
  %239 = vmatprep.subr.mxu0 0.0
  %240 = vmatpush2.xpose.msra.mxu0 0.0
  %241 = vmatprep.subr.mxu0 0.0
  %242 = vmatpush2.xpose.msra.mxu0 0.0
  %243 = vmatprep.subr.mxu0 0.0
  %244 = vmatpush2.xpose.msra.mxu0 0.0
  %245 = vmatprep.subr.mxu0 0.0
  %246 = vmatpush2.xpose.msra.mxu0 0.0
  %247 = vmatprep.subr.mxu0 0.0
  %248 = vmatpush2.xpose.msra.mxu0 0.0
  %249 = vmatprep.subr.mxu0 0.0
  %250 = vmatpush2.xpose.msra.mxu0 0.0
  %251 = vmatprep.subr.mxu0 0.0
  %252 = vmatpush2.xpose.msra.mxu0 %v203
  %253 = vmatprep.subr.mxu0 0.0
  %254 = vmatpush2.xpose.msra.mxu0 %v200
  %255 = vmatprep.subr.mxu0 0.0
  %256 = vmatpush2.xpose.msra.mxu0 %v197
  %257 = vmatprep.subr.mxu0 0.0
  %258 = vmatpush2.xpose.msra.mxu0 %v194
  %259 = vmatprep.subr.mxu0 0.0
  %260 = vmatpush2.xpose.msra.mxu0 %v191
  %261 = vmatprep.subr.mxu0 0.0
  %262 = vmatpush2.xpose.msra.mxu0 %v188
  %263 = vmatprep.subr.mxu0 0.0
  %264 = vmatpush2.xpose.msra.mxu0 %v185
  %265 = vmatprep.subr.mxu0 0.0
  %266 = vmatpush2.xpose.msra.mxu0 %v182
  %267 = vmatprep.subr.mxu0 0.0
  %268 = vmatpush2.xpose.msra.mxu0 %v179
  %269 = vmatprep.mubr.f32.mxu0 0.0
  %270 = vmatmul.mubr.f32.gmra.mxu0 %v92
  %v271 = vpop.f32.mrf.mxu0
  %v272 = vadd.f32 0.0, %v271
  %v273 = vpop.f32.mrf.mxu0
  %v274 = vadd.f32 0.0, %v273
  %275 = vmatprep.mubr.f32.mxu0 0.0
  %276 = vmatmul.mubr.f32.gmra.mxu0 %v95
  %v277 = vpop.f32.mrf.mxu0
  %v278 = vadd.f32 0.0, %v277
  %v279 = vpop.f32.mrf.mxu0
  %v280 = vadd.f32 0.0, %v279
  %281 = vmatprep.mubr.f32.mxu0 0.0
  %282 = vmatmul.mubr.f32.gmra.mxu0 %v98
  %v283 = vpop.f32.mrf.mxu0
  %v284 = vadd.f32 0.0, %v283
  %v285 = vpop.f32.mrf.mxu0
  %v286 = vadd.f32 0.0, %v285
  %287 = vmatprep.mubr.f32.mxu0 0.0
  %288 = vmatmul.mubr.f32.gmra.mxu0 %v101
  %v289 = vpop.f32.mrf.mxu0
  %v290 = vadd.f32 0.0, %v289
  %v291 = vpop.f32.mrf.mxu0
  %v292 = vadd.f32 0.0, %v291
  %293 = vmatprep.mubr.f32.mxu0 0.0
  %294 = vmatmul.mubr.f32.gmra.mxu0 %v104
  %v295 = vpop.f32.mrf.mxu0
  %v296 = vadd.f32 0.0, %v295
  %v297 = vpop.f32.mrf.mxu0
  %v298 = vadd.f32 0.0, %v297
  %299 = vmatprep.mubr.f32.mxu0 0.0
  %300 = vmatmul.mubr.f32.gmra.mxu0 %v107
  %v301 = vpop.f32.mrf.mxu0
  %v302 = vadd.f32 0.0, %v301
  %v303 = vpop.f32.mrf.mxu0
  %v304 = vadd.f32 0.0, %v303
  %305 = vmatprep.mubr.f32.mxu0 0.0
  %306 = vmatmul.mubr.f32.gmra.mxu0 %v110
  %v307 = vpop.f32.mrf.mxu0
  %v308 = vadd.f32 0.0, %v307
  %v309 = vpop.f32.mrf.mxu0
  %v310 = vadd.f32 0.0, %v309
  %311 = vmatprep.mubr.f32.mxu0 0.0
  %312 = vmatmul.mubr.f32.gmra.mxu0 %v113
  %v313 = vpop.f32.mrf.mxu0
  %v314 = vadd.f32 0.0, %v313
  %v315 = vpop.f32.mrf.mxu0
  %v316 = vadd.f32 0.0, %v315
  %317 = vmatprep.mubr.f32.mxu0 0.0
  %318 = vmatmul.mubr.f32.gmra.mxu0 %v116
  %v319 = vpop.f32.mrf.mxu0
  %v320 = vadd.f32 0.0, %v319
  %v321 = vpop.f32.mrf.mxu0
  %v322 = vadd.f32 0.0, %v321
  %323 = vmatprep.mubr.f32.mxu0 0.0
  %324 = vmatmul.mubr.f32.gmra.mxu0 %v119
  %v325 = vpop.f32.mrf.mxu0
  %v326 = vadd.f32 0.0, %v325
  %v327 = vpop.f32.mrf.mxu0
  %v328 = vadd.f32 0.0, %v327
  %329 = vmatprep.mubr.f32.mxu0 0.0
  %330 = vmatmul.mubr.f32.gmra.mxu0 %v122
  %v331 = vpop.f32.mrf.mxu0
  %v332 = vadd.f32 0.0, %v331
  %v333 = vpop.f32.mrf.mxu0
  %v334 = vadd.f32 0.0, %v333
  %335 = vmatprep.mubr.f32.mxu0 0.0
  %336 = vmatmul.mubr.f32.gmra.mxu0 %v125
  %v337 = vpop.f32.mrf.mxu0
  %v338 = vadd.f32 0.0, %v337
  %v339 = vpop.f32.mrf.mxu0
  %v340 = vadd.f32 0.0, %v339
  %341 = vmatprep.mubr.f32.mxu0 0.0
  %342 = vmatmul.mubr.f32.gmra.mxu0 %v128
  %v343 = vpop.f32.mrf.mxu0
  %v344 = vadd.f32 0.0, %v343
  %v345 = vpop.f32.mrf.mxu0
  %v346 = vadd.f32 0.0, %v345
  %347 = vdwg.mxu0
  %vm348 = vcmask 588800
  %v349 = vsel %vm348, %v274, -inf
  %v350 = vmax.f32 %v272, %v349
  %351 = vmax.xlane.f32.xlu0 %v350
  %v352 = vpop.xlane.xlu0 %351
  %v353 = vsel %vm348, %v280, -inf
  %v354 = vmax.f32 %v278, %v353
  %355 = vmax.xlane.f32.xlu0 %v354
  %v356 = vpop.xlane.xlu0 %355
  %v357 = vsel %vm348, %v286, -inf
  %v358 = vmax.f32 %v284, %v357
  %359 = vmax.xlane.f32.xlu0 %v358
  %v360 = vpop.xlane.xlu0 %359
  %v361 = vsel %vm348, %v292, -inf
  %v362 = vmax.f32 %v290, %v361
  %363 = vmax.xlane.f32.xlu0 %v362
  %v364 = vpop.xlane.xlu0 %363
  %v365 = vsel %vm348, %v298, -inf
  %v366 = vmax.f32 %v296, %v365
  %367 = vmax.xlane.f32.xlu0 %v366
  %v368 = vpop.xlane.xlu0 %367
  %v369 = vsel %vm348, %v304, -inf
  %v370 = vmax.f32 %v302, %v369
  %371 = vmax.xlane.f32.xlu0 %v370
  %v372 = vpop.xlane.xlu0 %371
  %v373 = vsel %vm348, %v310, -inf
  %v374 = vmax.f32 %v308, %v373
  %375 = vmax.xlane.f32.xlu0 %v374
  %v376 = vpop.xlane.xlu0 %375
  %v377 = vsel %vm348, %v316, -inf
  %v378 = vmax.f32 %v314, %v377
  %379 = vmax.xlane.f32.xlu0 %v378
  %v380 = vpop.xlane.xlu0 %379
  %v381 = vsel %vm348, %v322, -inf
  %v382 = vmax.f32 %v320, %v381
  %383 = vmax.xlane.f32.xlu0 %v382
  %v384 = vpop.xlane.xlu0 %383
  %v385 = vsel %vm348, %v328, -inf
  %v386 = vmax.f32 %v326, %v385
  %387 = vmax.xlane.f32.xlu0 %v386
  %v388 = vpop.xlane.xlu0 %387
  %v389 = vsel %vm348, %v334, -inf
  %v390 = vmax.f32 %v332, %v389
  %391 = vmax.xlane.f32.xlu0 %v390
  %v392 = vpop.xlane.xlu0 %391
  %v393 = vsel %vm348, %v340, -inf
  %v394 = vmax.f32 %v338, %v393
  %395 = vmax.xlane.f32.xlu0 %v394
  %v396 = vpop.xlane.xlu0 %395
  %vm397 = vcmask 1043456
  %v398 = vsel %vm397, %v344, -inf
  %vm399 = vcmask 584704
  %v400 = vsel %vm399, %v346, -inf
  %v401 = vmax.f32 %v398, %v400
  %402 = vmax.xlane.f32.xlu0 %v401
  %v403 = vpop.xlane.xlu0 %402
  %v404 = vsub.f32 %v272, %v352
  %v405 = vsub.f32 %v274, %v352
  %v406 = vsub.f32 %v278, %v356
  %v407 = vsub.f32 %v280, %v356
  %v408 = vsub.f32 %v284, %v360
  %v409 = vsub.f32 %v286, %v360
  %v410 = vsub.f32 %v290, %v364
  %v411 = vsub.f32 %v292, %v364
  %v412 = vsub.f32 %v296, %v368
  %v413 = vsub.f32 %v298, %v368
  %v414 = vsub.f32 %v302, %v372
  %v415 = vsub.f32 %v304, %v372
  %v416 = vsub.f32 %v308, %v376
  %v417 = vsub.f32 %v310, %v376
  %v418 = vsub.f32 %v314, %v380
  %v419 = vsub.f32 %v316, %v380
  %v420 = vsub.f32 %v320, %v384
  %v421 = vsub.f32 %v322, %v384
  %v422 = vsub.f32 %v326, %v388
  %v423 = vsub.f32 %v328, %v388
  %v424 = vsub.f32 %v332, %v392
  %v425 = vsub.f32 %v334, %v392
  %v426 = vsub.f32 %v338, %v396
  %v427 = vsub.f32 %v340, %v396
  %v428 = vsub.f32 %v344, %v403
  %v429 = vsub.f32 %v346, %v403
  %v430 = vmul.f32 %v404, 1.442695
  %v431 = vpow.pop %v430
  %v432 = vmul.f32 %v405, 1.442695
  %v433 = vpow.pop %v432
  %v434 = vmul.f32 %v406, 1.442695
  %v435 = vpow.pop %v434
  %v436 = vmul.f32 %v407, 1.442695
  %v437 = vpow.pop %v436
  %v438 = vmul.f32 %v408, 1.442695
  %v439 = vpow.pop %v438
  %v440 = vmul.f32 %v409, 1.442695
  %v441 = vpow.pop %v440
  %v442 = vmul.f32 %v410, 1.442695
  %v443 = vpow.pop %v442
  %v444 = vmul.f32 %v411, 1.442695
  %v445 = vpow.pop %v444
  %v446 = vmul.f32 %v412, 1.442695
  %v447 = vpow.pop %v446
  %v448 = vmul.f32 %v413, 1.442695
  %v449 = vpow.pop %v448
  %v450 = vmul.f32 %v414, 1.442695
  %v451 = vpow.pop %v450
  %v452 = vmul.f32 %v415, 1.442695
  %v453 = vpow.pop %v452
  %v454 = vmul.f32 %v416, 1.442695
  %v455 = vpow.pop %v454
  %v456 = vmul.f32 %v417, 1.442695
  %v457 = vpow.pop %v456
  %v458 = vmul.f32 %v418, 1.442695
  %v459 = vpow.pop %v458
  %v460 = vmul.f32 %v419, 1.442695
  %v461 = vpow.pop %v460
  %v462 = vmul.f32 %v420, 1.442695
  %v463 = vpow.pop %v462
  %v464 = vmul.f32 %v421, 1.442695
  %v465 = vpow.pop %v464
  %v466 = vmul.f32 %v422, 1.442695
  %v467 = vpow.pop %v466
  %v468 = vmul.f32 %v423, 1.442695
  %v469 = vpow.pop %v468
  %v470 = vmul.f32 %v424, 1.442695
  %v471 = vpow.pop %v470
  %v472 = vmul.f32 %v425, 1.442695
  %v473 = vpow.pop %v472
  %v474 = vmul.f32 %v426, 1.442695
  %v475 = vpow.pop %v474
  %v476 = vmul.f32 %v427, 1.442695
  %v477 = vpow.pop %v476
  %v478 = vmul.f32 %v428, 1.442695
  %v479 = vpow.pop %v478
  %v480 = vmul.f32 %v429, 1.442695
  %v481 = vpow.pop %v480
  %v482 = vsel %vm348, %v433, 0.0
  %v483 = vadd.f32 %v431, %v482
  %484 = vadd.xlane.f32.xlu0 %v483
  %v485 = vpop.xlane.xlu0 %484
  %v486 = vsel %vm348, %v437, 0.0
  %v487 = vadd.f32 %v435, %v486
  %488 = vadd.xlane.f32.xlu0 %v487
  %v489 = vpop.xlane.xlu0 %488
  %v490 = vsel %vm348, %v441, 0.0
  %v491 = vadd.f32 %v439, %v490
  %492 = vadd.xlane.f32.xlu0 %v491
  %v493 = vpop.xlane.xlu0 %492
  %v494 = vsel %vm348, %v445, 0.0
  %v495 = vadd.f32 %v443, %v494
  %496 = vadd.xlane.f32.xlu0 %v495
  %v497 = vpop.xlane.xlu0 %496
  %v498 = vsel %vm348, %v449, 0.0
  %v499 = vadd.f32 %v447, %v498
  %500 = vadd.xlane.f32.xlu0 %v499
  %v501 = vpop.xlane.xlu0 %500
  %v502 = vsel %vm348, %v453, 0.0
  %v503 = vadd.f32 %v451, %v502
  %504 = vadd.xlane.f32.xlu0 %v503
  %v505 = vpop.xlane.xlu0 %504
  %v506 = vsel %vm348, %v457, 0.0
  %v507 = vadd.f32 %v455, %v506
  %508 = vadd.xlane.f32.xlu0 %v507
  %v509 = vpop.xlane.xlu0 %508
  %v510 = vsel %vm348, %v461, 0.0
  %v511 = vadd.f32 %v459, %v510
  %512 = vadd.xlane.f32.xlu0 %v511
  %v513 = vpop.xlane.xlu0 %512
  %v514 = vsel %vm348, %v465, 0.0
  %v515 = vadd.f32 %v463, %v514
  %516 = vadd.xlane.f32.xlu0 %v515
  %v517 = vpop.xlane.xlu0 %516
  %v518 = vsel %vm348, %v469, 0.0
  %v519 = vadd.f32 %v467, %v518
  %520 = vadd.xlane.f32.xlu0 %v519
  %v521 = vpop.xlane.xlu0 %520
  %v522 = vsel %vm348, %v473, 0.0
  %v523 = vadd.f32 %v471, %v522
  %524 = vadd.xlane.f32.xlu0 %v523
  %v525 = vpop.xlane.xlu0 %524
  %v526 = vsel %vm348, %v477, 0.0
  %v527 = vadd.f32 %v475, %v526
  %528 = vadd.xlane.f32.xlu0 %v527
  %v529 = vpop.xlane.xlu0 %528
  %v530 = vsel %vm397, %v479, 0.0
  %v531 = vsel %vm399, %v481, 0.0
  %v532 = vadd.f32 %v530, %v531
  %533 = vadd.xlane.f32.xlu0 %v532
  %v534 = vpop.xlane.xlu0 %533
  %v535 = vrcp.pop %v485
  %v536 = vmul.f32 %v431, %v535
  %v537 = vmul.f32 %v433, %v535
  %v538 = vrcp.pop %v489
  %v539 = vmul.f32 %v435, %v538
  %v540 = vmul.f32 %v437, %v538
  %v541 = vrcp.pop %v493
  %v542 = vmul.f32 %v439, %v541
  %v543 = vmul.f32 %v441, %v541
  %v544 = vrcp.pop %v497
  %v545 = vmul.f32 %v443, %v544
  %v546 = vmul.f32 %v445, %v544
  %v547 = vrcp.pop %v501
  %v548 = vmul.f32 %v447, %v547
  %v549 = vmul.f32 %v449, %v547
  %v550 = vrcp.pop %v505
  %v551 = vmul.f32 %v451, %v550
  %v552 = vmul.f32 %v453, %v550
  %v553 = vrcp.pop %v509
  %v554 = vmul.f32 %v455, %v553
  %v555 = vmul.f32 %v457, %v553
  %v556 = vrcp.pop %v513
  %v557 = vmul.f32 %v459, %v556
  %v558 = vmul.f32 %v461, %v556
  %v559 = vrcp.pop %v517
  %v560 = vmul.f32 %v463, %v559
  %v561 = vmul.f32 %v465, %v559
  %v562 = vrcp.pop %v521
  %v563 = vmul.f32 %v467, %v562
  %v564 = vmul.f32 %v469, %v562
  %v565 = vrcp.pop %v525
  %v566 = vmul.f32 %v471, %v565
  %v567 = vmul.f32 %v473, %v565
  %v568 = vrcp.pop %v529
  %v569 = vmul.f32 %v475, %v568
  %v570 = vmul.f32 %v477, %v568
  %v571 = vrcp.pop %v534
  %v572 = vmul.f32 %v479, %v571
  %v573 = vmul.f32 %v481, %v571
  %v575 = vsel %vm348, %v537, 0
  %v578 = vsel %vm348, %v540, 0
  %v581 = vsel %vm348, %v543, 0
  %v584 = vsel %vm348, %v546, 0
  %v587 = vsel %vm348, %v549, 0
  %v590 = vsel %vm348, %v552, 0
  %v593 = vsel %vm348, %v555, 0
  %v596 = vsel %vm348, %v558, 0
  %v599 = vsel %vm348, %v561, 0
  %v602 = vsel %vm348, %v564, 0
  %v605 = vsel %vm348, %v567, 0
  %v608 = vsel %vm348, %v570, 0
  %v611 = vsel %vm348, %v573, 0
  %613 = vmatprep.subr.mxu0 0.0
  %614 = vmatpush1.msra.mxu0 %v80
  %615 = vmatprep.subr.mxu0 0.0
  %616 = vmatpush1.msra.mxu0 %v79
  %617 = vmatprep.subr.mxu0 0.0
  %618 = vmatpush1.msra.mxu0 %v78
  %619 = vmatprep.subr.mxu0 0.0
  %620 = vmatpush1.msra.mxu0 %v77
  %621 = vmatprep.subr.mxu0 0.0
  %622 = vmatpush1.msra.mxu0 %v76
  %623 = vmatprep.subr.mxu0 0.0
  %624 = vmatpush1.msra.mxu0 %v75
  %625 = vmatprep.subr.mxu0 0.0
  %626 = vmatpush1.msra.mxu0 %v74
  %627 = vmatprep.subr.mxu0 0.0
  %628 = vmatpush1.msra.mxu0 %v73
  %629 = vmatprep.subr.mxu0 0.0
  %630 = vmatpush1.msra.mxu0 %v72
  %631 = vmatprep.subr.mxu0 0.0
  %632 = vmatpush1.msra.mxu0 %v71
  %633 = vmatprep.subr.mxu0 0.0
  %634 = vmatpush1.msra.mxu0 %v70
  %635 = vmatprep.subr.mxu0 0.0
  %636 = vmatpush1.msra.mxu0 %v69
  %637 = vmatprep.subr.mxu0 0.0
  %638 = vmatpush1.msra.mxu0 %v68
  %639 = vmatprep.subr.mxu0 0.0
  %640 = vmatpush1.msra.mxu0 %v67
  %641 = vmatprep.subr.mxu0 0.0
  %642 = vmatpush1.msra.mxu0 %v66
  %643 = vmatprep.subr.mxu0 0.0
  %644 = vmatpush1.msra.mxu0 %v65
  %645 = vmatprep.subr.mxu0 0.0
  %646 = vmatpush2.msra.mxu0 0.0
  %647 = vmatprep.subr.mxu0 0.0
  %648 = vmatpush2.msra.mxu0 0.0
  %649 = vmatprep.subr.mxu0 0.0
  %650 = vmatpush2.msra.mxu0 0.0
  %651 = vmatprep.subr.mxu0 0.0
  %652 = vmatpush2.msra.mxu0 0.0
  %653 = vmatprep.subr.mxu0 0.0
  %654 = vmatpush2.msra.mxu0 0.0
  %655 = vmatprep.subr.mxu0 0.0
  %656 = vmatpush2.msra.mxu0 0.0
  %657 = vmatprep.subr.mxu0 0.0
  %658 = vmatpush2.msra.mxu0 0.0
  %659 = vmatprep.subr.mxu0 0.0
  %660 = vmatpush2.msra.mxu0 %v89
  %661 = vmatprep.subr.mxu0 0.0
  %662 = vmatpush2.msra.mxu0 %v88
  %663 = vmatprep.subr.mxu0 0.0
  %664 = vmatpush2.msra.mxu0 %v87
  %665 = vmatprep.subr.mxu0 0.0
  %666 = vmatpush2.msra.mxu0 %v86
  %667 = vmatprep.subr.mxu0 0.0
  %668 = vmatpush2.msra.mxu0 %v85
  %669 = vmatprep.subr.mxu0 0.0
  %670 = vmatpush2.msra.mxu0 %v84
  %671 = vmatprep.subr.mxu0 0.0
  %672 = vmatpush2.msra.mxu0 %v83
  %673 = vmatprep.subr.mxu0 0.0
  %674 = vmatpush2.msra.mxu0 %v82
  %675 = vmatprep.subr.mxu0 0.0
  %676 = vmatpush2.msra.mxu0 %v81
  %677 = vmatprep.mubr.f32.mxu0 %v575
  %678 = vmatmul.mubr.f32.gmra.mxu0 %v536
  %v679 = vpop.f32.mrf.mxu0
  %v680 = vadd.f32 0.0, %v679
  %v681 = vpop.f32.mrf.mxu0
  %682 = vmatprep.mubr.f32.mxu0 %v578
  %683 = vmatmul.mubr.f32.gmra.mxu0 %v539
  %v684 = vpop.f32.mrf.mxu0
  %v685 = vadd.f32 0.0, %v684
  %v686 = vpop.f32.mrf.mxu0
  %687 = vmatprep.mubr.f32.mxu0 %v581
  %688 = vmatmul.mubr.f32.gmra.mxu0 %v542
  %v689 = vpop.f32.mrf.mxu0
  %v690 = vadd.f32 0.0, %v689
  %v691 = vpop.f32.mrf.mxu0
  %692 = vmatprep.mubr.f32.mxu0 %v584
  %693 = vmatmul.mubr.f32.gmra.mxu0 %v545
  %v694 = vpop.f32.mrf.mxu0
  %v695 = vadd.f32 0.0, %v694
  %v696 = vpop.f32.mrf.mxu0
  %697 = vmatprep.mubr.f32.mxu0 %v587
  %698 = vmatmul.mubr.f32.gmra.mxu0 %v548
  %v699 = vpop.f32.mrf.mxu0
  %v700 = vadd.f32 0.0, %v699
  %v701 = vpop.f32.mrf.mxu0
  %702 = vmatprep.mubr.f32.mxu0 %v590
  %703 = vmatmul.mubr.f32.gmra.mxu0 %v551
  %v704 = vpop.f32.mrf.mxu0
  %v705 = vadd.f32 0.0, %v704
  %v706 = vpop.f32.mrf.mxu0
  %707 = vmatprep.mubr.f32.mxu0 %v593
  %708 = vmatmul.mubr.f32.gmra.mxu0 %v554
  %v709 = vpop.f32.mrf.mxu0
  %v710 = vadd.f32 0.0, %v709
  %v711 = vpop.f32.mrf.mxu0
  %712 = vmatprep.mubr.f32.mxu0 %v596
  %713 = vmatmul.mubr.f32.gmra.mxu0 %v557
  %v714 = vpop.f32.mrf.mxu0
  %v715 = vadd.f32 0.0, %v714
  %v716 = vpop.f32.mrf.mxu0
  %717 = vmatprep.mubr.f32.mxu0 %v599
  %718 = vmatmul.mubr.f32.gmra.mxu0 %v560
  %v719 = vpop.f32.mrf.mxu0
  %v720 = vadd.f32 0.0, %v719
  %v721 = vpop.f32.mrf.mxu0
  %722 = vmatprep.mubr.f32.mxu0 %v602
  %723 = vmatmul.mubr.f32.gmra.mxu0 %v563
  %v724 = vpop.f32.mrf.mxu0
  %v725 = vadd.f32 0.0, %v724
  %v726 = vpop.f32.mrf.mxu0
  %727 = vmatprep.mubr.f32.mxu0 %v605
  %728 = vmatmul.mubr.f32.gmra.mxu0 %v566
  %v729 = vpop.f32.mrf.mxu0
  %v730 = vadd.f32 0.0, %v729
  %v731 = vpop.f32.mrf.mxu0
  %732 = vmatprep.mubr.f32.mxu0 %v608
  %733 = vmatmul.mubr.f32.gmra.mxu0 %v569
  %v734 = vpop.f32.mrf.mxu0
  %v735 = vadd.f32 0.0, %v734
  %v736 = vpop.f32.mrf.mxu0
  %737 = vmatprep.mubr.f32.mxu0 %v611
  %738 = vmatmul.mubr.f32.gmra.mxu0 %v572
  %v739 = vpop.f32.mrf.mxu0
  %v740 = vadd.f32 0.0, %v739
  %v741 = vpop.f32.mrf.mxu0
  %742 = vdwg.mxu0
  %743 = vst.msk [vmem:[%s3] sm:$0xff] %vm90, %v680
  %744 = vst.msk [vmem:[%s3 + $0x8] sm:$0xff] %vm90, %v685
  %745 = vst.msk [vmem:[%s3 + $0x10] sm:$0xff] %vm90, %v690
  %746 = vst.msk [vmem:[%s3 + $0x18] sm:$0xff] %vm90, %v695
  %747 = vst.msk [vmem:[%s3 + $0x20] sm:$0xff] %vm90, %v700
  %748 = vst.msk [vmem:[%s3 + $0x28] sm:$0xff] %vm90, %v705
  %749 = vst.msk [vmem:[%s3 + $0x30] sm:$0xff] %vm90, %v710
  %750 = vst.msk [vmem:[%s3 + $0x38] sm:$0xff] %vm90, %v715
  %751 = vst.msk [vmem:[%s3 + $0x40] sm:$0xff] %vm90, %v720
  %752 = vst.msk [vmem:[%s3 + $0x48] sm:$0xff] %vm90, %v725
  %753 = vst.msk [vmem:[%s3 + $0x50] sm:$0xff] %vm90, %v730
  %754 = vst.msk [vmem:[%s3 + $0x58] sm:$0xff] %vm90, %v735
  %vm755 = vcmask 76800
  %756 = vst.msk [vmem:[%s3 + $0x60] sm:$0xf] %vm755, %v740
  // Predicated region
  $region14: #{tpu_custom_call.1} parent=0 // pred_check
    _
  $region15: #{tpu_custom_call.1} parent=0 // pred_check_branch
    %758 = sbr.rel (0) target = $region17
  $region16: #{tpu_custom_call.1} parent=0 // pred_region
    _
  $region17: #{tpu_custom_call.1} parent=0 // pred_fallthru
    _
  // Predicated region
  $region18: #{tpu_custom_call.1} parent=0 // pred_check
    _
  $region19: #{tpu_custom_call.1} parent=0 // pred_check_branch
    %760 = sbr.rel (0) target = $region21
  $region20: #{tpu_custom_call.1} parent=0 // pred_region
    _
  $region21: #{tpu_custom_call.1} parent=0 // pred_fallthru
    _

</llo_original>
